<compile_context>
chip_gen: v7x
topology: tpu7x:2x2x1
jax: 0.10.0
libtpu: 0.0.40
codegen_flags: <defaults>
</compile_context>

<pallas_src>
import math

import jax
import jax.numpy as jnp
from jax.experimental import pallas as pl
from jax.experimental.pallas import tpu as pltpu


# fused temporal-table row layout: [hour(24) | weekday(7) | day(32) | month(13) | pad]
_HOUR, _WD, _DAY, _MONTH = 24, 7, 32, 13
_T_REAL = _HOUR + _WD + _DAY + _MONTH              # 76
_T_PAD = 128                                       # lane-aligned contraction width
# (x_mark column, base row): col 3=hour, 2=weekday, 1=day, 0=month
_COL_BASE = ((3, 0), (2, _HOUR), (1, _HOUR + _WD), (0, _HOUR + _WD + _DAY))

_VMEM_LIMIT_BYTES = 48 * 1024 * 1024    # > v5e's 16 MiB scoped default, < v7x 64 MiB phys
_BLOCK_BUDGET_BYTES = 20 * 1024 * 1024  # cap on per-step live bytes (v7x-safe)


def _sinusoidal_table(n_rows, d_model):
    """FixedEmbedding / PositionalEmbedding style sinusoidal table."""
    position = jnp.arange(n_rows, dtype=jnp.float32)[:, None]            # [n, 1]
    div_term = jnp.exp(
        jnp.arange(0, d_model, 2, dtype=jnp.float32)
        * -(math.log(10000.0) / d_model))                                # [d/2]
    tab = jnp.zeros((n_rows, d_model), dtype=jnp.float32)
    tab = tab.at[:, 0::2].set(jnp.sin(position * div_term))
    tab = tab.at[:, 1::2].set(jnp.cos(position * div_term))
    return tab


def _data_embedding_kernel(x_ref, xm_ref, wconv_ref, tab_ref, o_ref):
    # x_ref     : [Bt, L, C]    f32
    # xm_ref    : [Bt, L, 4]    i32 (month, day, weekday, hour)
    # wconv_ref : [3, C, D]     f32 (tap k applied to x[t-1+k])
    # tab_ref   : [T_PAD, D]    f32 fused sinusoidal tables (zero row-pad)
    # o_ref     : [Bt, L, D]    f32
    x = x_ref[...]
    idx = xm_ref[...]
    bt, seq_len, c = x.shape
    d = o_ref.shape[-1]
    rows = bt * seq_len

    # circular Conv1d taps: each block holds the FULL sequence, so a roll along
    # axis 1 implements padding_mode='circular' exactly (tiny 7-lane XLU work).
    # TODO(synk): if L ever gets tiled across the grid, feed x[t-1]/x[t+1] via
    # halo'd in_specs instead of rolling in-kernel.
    x_prev = jnp.roll(x, 1, axis=1)
    x_next = jnp.roll(x, -1, axis=1)

    # one-hot over the fused temporal table, built directly in 2D.  The four
    # index ranges are disjoint, so OR == sum; a single convert to f32 at the end.
    idx2 = idx.reshape(rows, 4)
    row_iota = jax.lax.broadcasted_iota(jnp.int32, (rows, _T_PAD), 1)
    hit = (idx2[:, 3:4] == row_iota)                       # hour, base 0
    for col, base in _COL_BASE[1:]:
        hit = hit | ((idx2[:, col:col + 1] + base) == row_iota)
    onehot = hit.astype(jnp.float32)

    # four small MXU dots accumulated in f32 — no lane concat, no K relayout.
    acc = jnp.dot(x_prev.reshape(rows, c), wconv_ref[0],
                  preferred_element_type=jnp.float32)
    acc += jnp.dot(x.reshape(rows, c), wconv_ref[1],
                   preferred_element_type=jnp.float32)
    acc += jnp.dot(x_next.reshape(rows, c), wconv_ref[2],
                   preferred_element_type=jnp.float32)
    acc += jnp.dot(onehot, tab_ref[...], preferred_element_type=jnp.float32)

    o_ref[...] = acc.reshape(bt, seq_len, d).astype(o_ref.dtype)


def _pick_block_b(batch, seq_len, row_bytes, target_rows=2048):
    """Batches per grid step: big enough (~2048 rows) to amortize the ~0.35 us
    per-step overhead, capped by a VMEM byte budget (v7x-safe), and leaving
    >= 2 grid steps when possible so v7x can use both TensorCores."""
    bb = max(1, min(batch, max(1, target_rows // max(seq_len, 1))))
    while bb > 1 and bb * seq_len * row_bytes > _BLOCK_BUDGET_BYTES:
        bb -= 1
    if batch >= 2:
        bb = min(bb, batch // 2)      # guarantee grid length >= 2 (v7x: 2 TCs)
    bb = max(bb, 1)
    while batch % bb:
        bb -= 1
    return bb


def data_embedding_wo_pos(x, x_mark, conv_w, hour_tab, wd_tab, day_tab, month_tab):
    """x: [B, L, C] f32; x_mark: [B, L, 4] int (month, day, weekday, hour);
       conv_w: [3, C, D] f32 (tap k applied to x[t-1+k]); *_tab: [n, D] f32."""
    B, L, C = x.shape
    D = conv_w.shape[-1]

    # fused temporal table, row-padded to a lane-aligned contraction width (128).
    tab = jnp.concatenate([hour_tab, wd_tab, day_tab, month_tab], axis=0)   # [76, D]
    tab = jnp.pad(tab, ((0, _T_PAD - tab.shape[0]), (0, 0)))                # [128, D]

    # per-(b,t)-row live VMEM bytes: double-buffered ins/outs + intermediates
    row_bytes = 4 * (2 * C + 2 * 4 + 2 * D          # x, x_mark, out (x2 buffers)
                     + 2 * C + _T_PAD + 2 * D)      # rolled taps, onehot, acc
    Bt = _pick_block_b(B, L, row_bytes)
    grid = (B // Bt,)

    # Output is stored directly at width D (no Dp padding + post-kernel slice):
    # for d_model % 128 == 0 the stores are lane-dense; otherwise they are
    # masked, which is still cheaper than an extra full-tensor XLA copy.
    # TODO(synk): for production d_model, cast x/weights to bf16 (keep the f32
    # accumulate) and emit a bf16 output to halve the dominant HBM write stream.
    return pl.pallas_call(
        _data_embedding_kernel,
        out_shape=jax.ShapeDtypeStruct((B, L, D), jnp.float32),
        grid_spec=pltpu.PrefetchScalarGridSpec(
            num_scalar_prefetch=0,
            grid=grid,
            in_specs=[
                pl.BlockSpec((Bt, L, C), lambda b: (b, 0, 0)),
                pl.BlockSpec((Bt, L, 4), lambda b: (b, 0, 0)),
                pl.BlockSpec((3, C, D), lambda b: (0, 0, 0)),   # resident conv taps
                pl.BlockSpec((_T_PAD, D), lambda b: (0, 0)),    # resident tables
            ],
            out_specs=pl.BlockSpec((Bt, L, D), lambda b: (b, 0, 0)),
        ),
        compiler_params=pltpu.CompilerParams(
            dimension_semantics=("parallel",),
            vmem_limit_bytes=_VMEM_LIMIT_BYTES),
    )(x, x_mark.astype(jnp.int32), conv_w, tab)


def _reference(x, x_mark, conv_w, hour_tab, wd_tab, day_tab, month_tab):
    x_prev = jnp.roll(x, 1, axis=1)
    x_next = jnp.roll(x, -1, axis=1)
    conv = (jnp.einsum('blc,cd->bld', x_prev, conv_w[0])
            + jnp.einsum('blc,cd->bld', x, conv_w[1])
            + jnp.einsum('blc,cd->bld', x_next, conv_w[2]))
    temporal = (hour_tab[x_mark[..., 3]]
                + wd_tab[x_mark[..., 2]]
                + day_tab[x_mark[..., 1]]
                + month_tab[x_mark[..., 0]])
    return conv + temporal


if __name__ == "__main__":
    B, L, C_IN, D_MODEL = 2, 8, 7, 32

    key = jax.random.PRNGKey(0)
    k_x, k_w, k_mark = jax.random.split(key, 3)

    # value series
    x = jax.random.normal(k_x, (B, L, C_IN), dtype=jnp.float32)

    # time marks: columns [month(0..12), day(0..31), weekday(0..6), hour(0..23)]
    km1, km2, km3, km4 = jax.random.split(k_mark, 4)
    x_mark = jnp.stack(
        [jax.random.randint(km1, (B, L), 0, 13),
         jax.random.randint(km2, (B, L), 0, 32),
         jax.random.randint(km3, (B, L), 0, 7),
         jax.random.randint(km4, (B, L), 0, 24)],
        axis=-1).astype(jnp.int32)

    # Conv1d weight [d_model, c_in, 3], kaiming_normal_(fan_in, leaky_relu a=0.01)
    fan_in = C_IN * 3
    gain = math.sqrt(2.0 / (1.0 + 0.01 ** 2))
    std = gain / math.sqrt(fan_in)
    w_torch_layout = jax.random.normal(k_w, (D_MODEL, C_IN, 3), dtype=jnp.float32) * std
    # rearrange to [3, c_in, d_model] (tap k applied to x[t-1+k], cross-correlation)
    conv_w = jnp.transpose(w_torch_layout, (2, 1, 0))

    # fixed sinusoidal temporal embedding tables (freq='h', embed_type='fixed')
    hour_tab = _sinusoidal_table(24, D_MODEL)
    wd_tab = _sinusoidal_table(7, D_MODEL)
    day_tab = _sinusoidal_table(32, D_MODEL)
    month_tab = _sinusoidal_table(13, D_MODEL)

    out = data_embedding_wo_pos(x, x_mark, conv_w,
                                hour_tab, wd_tab, day_tab, month_tab)
    out = jax.block_until_ready(out)

    ref = _reference(x, x_mark, conv_w, hour_tab, wd_tab, day_tab, month_tab)
    assert out.shape == (B, L, D_MODEL)
    assert jnp.allclose(out, ref, atol=1e-4, rtol=1e-4)

    print("KERNEL_OK")
</pallas_src>

<mosaic_0001>
module attributes {stable_mosaic.version = 11 : i64} {
  func.func @_data_embedding_kernel(%arg0: i32, %arg1: memref<1x8x7xf32, #tpu.memory_space<vmem>>, %arg2: memref<1x8x4xi32, #tpu.memory_space<vmem>>, %arg3: memref<3x7x32xf32, #tpu.memory_space<vmem>>, %arg4: memref<128x32xf32, #tpu.memory_space<vmem>>, %arg5: memref<1x8x32xf32, #tpu.memory_space<vmem>>) attributes {dimension_semantics = [#tpu.dimension_semantics<parallel>], iteration_bounds = array<i64: 2>, scalar_prefetch = 0 : i64, scratch_operands = 0 : i64, tpu.core_type = #tpu.core_type<tc>, window_params = [{transform_indices = @transform_0, window_bounds = array<i64: 1, 8, 7>}, {transform_indices = @transform_1, window_bounds = array<i64: 1, 8, 4>}, {pipeline_mode = #tpu.pipeline_mode<synchronous>, transform_indices = @transform_2, window_bounds = array<i64: 3, 7, 32>}, {pipeline_mode = #tpu.pipeline_mode<synchronous>, transform_indices = @transform_3, window_bounds = array<i64: 128, 32>}, {transform_indices = @transform_4, window_bounds = array<i64: 1, 8, 32>}]} {
    %c0 = arith.constant 0 : index
    %c0_0 = arith.constant 0 : index
    %c0_1 = arith.constant 0 : index
    %0 = vector.load %arg1[%c0, %c0_0, %c0_1] : memref<1x8x7xf32, #tpu.memory_space<vmem>>, vector<1x8x7xf32>
    %c0_2 = arith.constant 0 : index
    %c0_3 = arith.constant 0 : index
    %c0_4 = arith.constant 0 : index
    %1 = vector.load %arg2[%c0_2, %c0_3, %c0_4] : memref<1x8x4xi32, #tpu.memory_space<vmem>>, vector<1x8x4xi32>
    %2 = vector.extract_strided_slice %0 {offsets = [0, 7, 0], sizes = [1, 1, 7], strides = [1, 1, 1]} : vector<1x8x7xf32> to vector<1x1x7xf32>
    %3 = vector.extract_strided_slice %0 {offsets = [0, 0, 0], sizes = [1, 7, 7], strides = [1, 1, 1]} : vector<1x8x7xf32> to vector<1x7x7xf32>
    %4 = tpu.concatenate %2, %3 in 1 : vector<1x1x7xf32>, vector<1x7x7xf32> -> vector<1x8x7xf32>
    %5 = vector.extract_strided_slice %0 {offsets = [0, 1, 0], sizes = [1, 7, 7], strides = [1, 1, 1]} : vector<1x8x7xf32> to vector<1x7x7xf32>
    %6 = vector.extract_strided_slice %0 {offsets = [0, 0, 0], sizes = [1, 1, 7], strides = [1, 1, 1]} : vector<1x8x7xf32> to vector<1x1x7xf32>
    %7 = tpu.concatenate %5, %6 in 1 : vector<1x7x7xf32>, vector<1x1x7xf32> -> vector<1x8x7xf32>
    %8 = vector.shape_cast %1 : vector<1x8x4xi32> to vector<8x4xi32>
    %9 = tpu.iota {dimensions = array<i32: 1>} : vector<8x128xi32>
    %10 = vector.extract_strided_slice %8 {offsets = [0, 3], sizes = [8, 1], strides = [1, 1]} : vector<8x4xi32> to vector<8x1xi32>
    %11 = vector.broadcast %10 : vector<8x1xi32> to vector<8x128xi32>
    %12 = arith.cmpi eq, %11, %9 : vector<8x128xi32>
    %13 = vector.extract_strided_slice %8 {offsets = [0, 2], sizes = [8, 1], strides = [1, 1]} : vector<8x4xi32> to vector<8x1xi32>
    %c24_i32 = arith.constant 24 : i32
    %14 = vector.broadcast %c24_i32 : i32 to vector<8x1xi32>
    %15 = arith.addi %13, %14 : vector<8x1xi32>
    %16 = vector.broadcast %15 : vector<8x1xi32> to vector<8x128xi32>
    %17 = arith.cmpi eq, %16, %9 : vector<8x128xi32>
    %18 = arith.ori %12, %17 : vector<8x128xi1>
    %19 = vector.extract_strided_slice %8 {offsets = [0, 1], sizes = [8, 1], strides = [1, 1]} : vector<8x4xi32> to vector<8x1xi32>
    %c31_i32 = arith.constant 31 : i32
    %20 = vector.broadcast %c31_i32 : i32 to vector<8x1xi32>
    %21 = arith.addi %19, %20 : vector<8x1xi32>
    %22 = vector.broadcast %21 : vector<8x1xi32> to vector<8x128xi32>
    %23 = arith.cmpi eq, %22, %9 : vector<8x128xi32>
    %24 = arith.ori %18, %23 : vector<8x128xi1>
    %25 = vector.extract_strided_slice %8 {offsets = [0, 0], sizes = [8, 1], strides = [1, 1]} : vector<8x4xi32> to vector<8x1xi32>
    %c63_i32 = arith.constant 63 : i32
    %26 = vector.broadcast %c63_i32 : i32 to vector<8x1xi32>
    %27 = arith.addi %25, %26 : vector<8x1xi32>
    %28 = vector.broadcast %27 : vector<8x1xi32> to vector<8x128xi32>
    %29 = arith.cmpi eq, %28, %9 : vector<8x128xi32>
    %30 = arith.ori %24, %29 : vector<8x128xi1>
    %31 = arith.extui %30 : vector<8x128xi1> to vector<8x128xi32>
    %32 = arith.sitofp %31 : vector<8x128xi32> to vector<8x128xf32>
    %33 = vector.shape_cast %4 : vector<1x8x7xf32> to vector<8x7xf32>
    %c0_5 = arith.constant 0 : index
    %c0_6 = arith.constant 0 : index
    %c0_7 = arith.constant 0 : index
    %34 = vector.load %arg3[%c0_5, %c0_6, %c0_7] : memref<3x7x32xf32, #tpu.memory_space<vmem>>, vector<1x7x32xf32>
    %35 = vector.shape_cast %34 : vector<1x7x32xf32> to vector<7x32xf32>
    %cst = arith.constant dense<0.000000e+00> : vector<8x32xf32>
    %36 = tpu.matmul %33, %35, %cst {dimension_numbers = #tpu.dot_dimension_numbers<[1], [0], [0], [1], [0, 0, 1, 1], [], []>} : vector<8x7xf32>, vector<7x32xf32>, vector<8x32xf32> -> vector<8x32xf32>
    %37 = vector.shape_cast %0 : vector<1x8x7xf32> to vector<8x7xf32>
    %c1 = arith.constant 1 : index
    %c0_8 = arith.constant 0 : index
    %c0_9 = arith.constant 0 : index
    %38 = vector.load %arg3[%c1, %c0_8, %c0_9] : memref<3x7x32xf32, #tpu.memory_space<vmem>>, vector<1x7x32xf32>
    %39 = vector.shape_cast %38 : vector<1x7x32xf32> to vector<7x32xf32>
    %cst_10 = arith.constant dense<0.000000e+00> : vector<8x32xf32>
    %40 = tpu.matmul %37, %39, %cst_10 {dimension_numbers = #tpu.dot_dimension_numbers<[1], [0], [0], [1], [0, 0, 1, 1], [], []>} : vector<8x7xf32>, vector<7x32xf32>, vector<8x32xf32> -> vector<8x32xf32>
    %41 = arith.addf %36, %40 : vector<8x32xf32>
    %42 = vector.shape_cast %7 : vector<1x8x7xf32> to vector<8x7xf32>
    %c2 = arith.constant 2 : index
    %c0_11 = arith.constant 0 : index
    %c0_12 = arith.constant 0 : index
    %43 = vector.load %arg3[%c2, %c0_11, %c0_12] : memref<3x7x32xf32, #tpu.memory_space<vmem>>, vector<1x7x32xf32>
    %44 = vector.shape_cast %43 : vector<1x7x32xf32> to vector<7x32xf32>
    %cst_13 = arith.constant dense<0.000000e+00> : vector<8x32xf32>
    %45 = tpu.matmul %42, %44, %cst_13 {dimension_numbers = #tpu.dot_dimension_numbers<[1], [0], [0], [1], [0, 0, 1, 1], [], []>} : vector<8x7xf32>, vector<7x32xf32>, vector<8x32xf32> -> vector<8x32xf32>
    %46 = arith.addf %41, %45 : vector<8x32xf32>
    %c0_14 = arith.constant 0 : index
    %c0_15 = arith.constant 0 : index
    %47 = vector.load %arg4[%c0_14, %c0_15] : memref<128x32xf32, #tpu.memory_space<vmem>>, vector<128x32xf32>
    %cst_16 = arith.constant dense<0.000000e+00> : vector<8x32xf32>
    %48 = tpu.matmul %32, %47, %cst_16 {dimension_numbers = #tpu.dot_dimension_numbers<[1], [0], [0], [1], [0, 0, 1, 1], [], []>} : vector<8x128xf32>, vector<128x32xf32>, vector<8x32xf32> -> vector<8x32xf32>
    %49 = arith.addf %46, %48 : vector<8x32xf32>
    %50 = vector.shape_cast %49 : vector<8x32xf32> to vector<1x8x32xf32>
    %c0_17 = arith.constant 0 : index
    %c0_18 = arith.constant 0 : index
    %c0_19 = arith.constant 0 : index
    %51 = vector.load %arg5[%c0_17, %c0_18, %c0_19] : memref<1x8x32xf32, #tpu.memory_space<vmem>>, vector<1x8x32xf32>
    tpu.vector_store %arg5[%c0_17, %c0_18, %c0_19], %50 {strides = array<i32>} : memref<1x8x32xf32, #tpu.memory_space<vmem>>, vector<1x8x32xf32>,
    return
  }
  func.func @transform_0(%arg0: i32) -> (i32, i32, i32) {
    %c0_i32 = arith.constant 0 : i32
    %c0_i32_0 = arith.constant 0 : i32
    %c0_i32_1 = arith.constant 0 : i32
    return %arg0, %c0_i32, %c0_i32_0 : i32, i32, i32
  }
  func.func @transform_1(%arg0: i32) -> (i32, i32, i32) {
    %c0_i32 = arith.constant 0 : i32
    %c0_i32_0 = arith.constant 0 : i32
    %c0_i32_1 = arith.constant 0 : i32
    return %arg0, %c0_i32, %c0_i32_0 : i32, i32, i32
  }
  func.func @transform_2(%arg0: i32) -> (i32, i32, i32) {
    %c0_i32 = arith.constant 0 : i32
    %c0_i32_0 = arith.constant 0 : i32
    %c0_i32_1 = arith.constant 0 : i32
    %c0_i32_2 = arith.constant 0 : i32
    return %c0_i32, %c0_i32_0, %c0_i32_1 : i32, i32, i32
  }
  func.func @transform_3(%arg0: i32) -> (i32, i32) {
    %c0_i32 = arith.constant 0 : i32
    %c0_i32_0 = arith.constant 0 : i32
    %c0_i32_1 = arith.constant 0 : i32
    return %c0_i32, %c0_i32_0 : i32, i32
  }
  func.func @transform_4(%arg0: i32) -> (i32, i32, i32) {
    %c0_i32 = arith.constant 0 : i32
    %c0_i32_0 = arith.constant 0 : i32
    %c0_i32_1 = arith.constant 0 : i32
    return %arg0, %c0_i32, %c0_i32_0 : i32, i32, i32
  }
}

</mosaic_0001>

<llo_original>
// kernel: tpu_custom_call.1
$region0: #{tpu_custom_call.1}
  #allocation0 [shape = 'u32[]', space=smem, size = 0x4, offset = 0x4, fixed_abs, tag = 'smem constant byte address 0x4 - core index']
  #allocation1 [shape = 'u32[144,128]{1,0:T(1,128)}', space=vmem, size = 0x12000, scoped, tag = 'internal scratch']
  %s0 = inlined_call_operand.vmem [shape: f32[2,8,7], index: 0, kind: input, shape index: {}]
  %s1 = inlined_call_operand.vmem [shape: s32[2,8,4], index: 1, kind: input, shape index: {}]
  %s2 = inlined_call_operand.vmem [shape: f32[3,7,32], index: 2, kind: input, shape index: {}]
  %s3 = inlined_call_operand.vmem [shape: f32[128,32], index: 3, kind: input, shape index: {}]
  %s4 = inlined_call_operand.hbm [shape: f32[2,8,32], index: 4, kind: output, shape index: {}]
  %s5 = sld [smem:[#allocation0]]
  $region49: #{tpu_custom_call.1} parent=0
    _
  %s7 = ssub.s32 1, %s5
  %s8 = scalar_select 0, %s7, %s5
  $region1: #{tpu_custom_call.1} parent=0
    #allocation2 [shape = 'u8[8192]{0}', space=vmem, size = 0x2000, scoped, tag = 'output window, operand 0']
    #allocation3 [shape = 's32[2]{0}', space=sflag, size = 0x8, scoped, tag = 'scoped memory for tpu_custom_call.1']
    %9 = vsyncpa [#allocation3], 0
    %s10 = scalar_lea.sflag [#allocation3], 1
    %11 = vsyncpa %s10, 0
    loop: start=0, step=1, limit=4
    $region2: #{tpu_custom_call.1} parent=1 // loop_pre_header
      _
    $region3: #{tpu_custom_call.1} parent=1 // loop_header
      %s13 = sphi 0, %s17
      %p14 = scmp.ge.s32.totalorder %s13, 4
      %s23 = sphi 0, %s25
      %s26 = sphi 0, %s23
      %s27 = sphi 0, %s26
      %s43 = sphi 0, %s27
      %s49 = sphi 0, %s51
      %s52 = sphi 0, %s49
      %s53 = sphi 0, %s52
      %s69 = sphi 0, %s53
      %s73 = sphi 0, %s73
      %s75 = sphi 0, %s73
      %s76 = sphi 0, %s75
      %s90 = sphi 0, %s76
      %s94 = sphi 0, %s94
      %s96 = sphi 0, %s94
      %s97 = sphi 0, %s96
      %s111 = sphi 0, %s97
      %s117 = sphi 0, %s119
      %s120 = sphi 0, %s117
      %s121 = sphi 0, %s120
      %s137 = sphi 0, %s121
    $region4: #{tpu_custom_call.1} parent=1 // loop_header_branch
      %16 = sbr.rel (%p14) target = $region8
    $region5: #{tpu_custom_call.1} parent=1 // loop_body
      %s18 = ssub.s32 %s13, 1
      %s19 = ssub.s32 %s13, 2
      %s20 = sadd.s32 %s13, 1
      %s21 = ssub.s32 %s13, %s20
      %p22 = scmp.eq.s32.totalorder %s21, 0
      %s24 = sadd.s32 %s23, 1
      %s25 = scalar_select %p22, %s23, %s24
      %p28 = pneg %p22
      %p29 = scmp.eq.s32.totalorder %s13, 1
      %p30 = por %p28, %p29
      %p31 = scmp.ne.s32.totalorder %s23, %s26
      %p32 = scmp.eq.s32.totalorder %s13, 0
      %p33 = por %p31, %p32
      %p34 = scmp.ne.s32.totalorder %s23, %s26
      %p35 = scmp.eq.s32.totalorder %s18, 1
      %p36 = por %p34, %p35
      %p37 = scmp.ne.s32.totalorder %s26, %s27
      %p38 = scmp.eq.s32.totalorder %s18, 0
      %p39 = por %p37, %p38
      %p40 = scmp.ne.s32.totalorder %s26, %s27
      %p41 = scmp.eq.s32.totalorder %s19, 1
      %p42 = por %p40, %p41
      %p44 = scmp.ne.s32.totalorder %s27, %s43
      %p45 = scmp.eq.s32.totalorder %s19, 0
      %p46 = por %p44, %p45
      %s47 = ssub.s32 %s13, %s20
      %p48 = scmp.eq.s32.totalorder %s47, 0
      %s50 = sadd.s32 %s49, 1
      %s51 = scalar_select %p48, %s49, %s50
      %p54 = pneg %p48
      %p55 = scmp.eq.s32.totalorder %s13, 1
      %p56 = por %p54, %p55
      %p57 = scmp.ne.s32.totalorder %s49, %s52
      %p58 = scmp.eq.s32.totalorder %s13, 0
      %p59 = por %p57, %p58
      %p60 = scmp.ne.s32.totalorder %s49, %s52
      %p61 = scmp.eq.s32.totalorder %s18, 1
      %p62 = por %p60, %p61
      %p63 = scmp.ne.s32.totalorder %s52, %s53
      %p64 = scmp.eq.s32.totalorder %s18, 0
      %p65 = por %p63, %p64
      %p66 = scmp.ne.s32.totalorder %s52, %s53
      %p67 = scmp.eq.s32.totalorder %s19, 1
      %p68 = por %p66, %p67
      %p70 = scmp.ne.s32.totalorder %s53, %s69
      %p71 = scmp.eq.s32.totalorder %s19, 0
      %p72 = por %p70, %p71
      %s74 = sadd.s32 %s73, 1
      %p77 = scmp.eq.s32.totalorder %s13, 1
      %p78 = scmp.ne.s32.totalorder %s73, %s75
      %p79 = scmp.eq.s32.totalorder %s13, 0
      %p80 = por %p78, %p79
      %p81 = scmp.ne.s32.totalorder %s73, %s75
      %p82 = scmp.eq.s32.totalorder %s18, 1
      %p83 = por %p81, %p82
      %p84 = scmp.ne.s32.totalorder %s75, %s76
      %p85 = scmp.eq.s32.totalorder %s18, 0
      %p86 = por %p84, %p85
      %p87 = scmp.ne.s32.totalorder %s75, %s76
      %p88 = scmp.eq.s32.totalorder %s19, 1
      %p89 = por %p87, %p88
      %p91 = scmp.ne.s32.totalorder %s76, %s90
      %p92 = scmp.eq.s32.totalorder %s19, 0
      %p93 = por %p91, %p92
      %s95 = sadd.s32 %s94, 1
      %p98 = scmp.eq.s32.totalorder %s13, 1
      %p99 = scmp.ne.s32.totalorder %s94, %s96
      %p100 = scmp.eq.s32.totalorder %s13, 0
      %p101 = por %p99, %p100
      %p102 = scmp.ne.s32.totalorder %s94, %s96
      %p103 = scmp.eq.s32.totalorder %s18, 1
      %p104 = por %p102, %p103
      %p105 = scmp.ne.s32.totalorder %s96, %s97
      %p106 = scmp.eq.s32.totalorder %s18, 0
      %p107 = por %p105, %p106
      %p108 = scmp.ne.s32.totalorder %s96, %s97
      %p109 = scmp.eq.s32.totalorder %s19, 1
      %p110 = por %p108, %p109
      %p112 = scmp.ne.s32.totalorder %s97, %s111
      %p113 = scmp.eq.s32.totalorder %s19, 0
      %p114 = por %p112, %p113
      %s115 = ssub.s32 %s13, %s20
      %p116 = scmp.eq.s32.totalorder %s115, 0
      %s118 = sadd.s32 %s117, 1
      %s119 = scalar_select %p116, %s117, %s118
      %p122 = pneg %p116
      %p123 = scmp.eq.s32.totalorder %s13, 1
      %p124 = por %p122, %p123
      %p125 = scmp.ne.s32.totalorder %s117, %s120
      %p126 = scmp.eq.s32.totalorder %s13, 0
      %p127 = por %p125, %p126
      %p128 = scmp.ne.s32.totalorder %s117, %s120
      %p129 = scmp.eq.s32.totalorder %s18, 1
      %p130 = por %p128, %p129
      %p131 = scmp.ne.s32.totalorder %s120, %s121
      %p132 = scmp.eq.s32.totalorder %s18, 0
      %p133 = por %p131, %p132
      %p134 = scmp.ne.s32.totalorder %s120, %s121
      %p135 = scmp.eq.s32.totalorder %s19, 1
      %p136 = por %p134, %p135
      %p138 = scmp.ne.s32.totalorder %s121, %s137
      %p139 = scmp.eq.s32.totalorder %s19, 0
      %p140 = por %p138, %p139
      %p141 = scmp.le.s32.totalorder 1, %s13
      %p142 = scmp.lt.s32.totalorder %s13, 3
      %p143 = pnand %p141, %p142
      %p144 = pneg %p143
      // Predicated region
      $region9: #{tpu_custom_call.1} parent=5 // pred_check
        _
      $region10: #{tpu_custom_call.1} parent=5 // pred_check_branch
        %146 = sbr.rel (%p143) target = $region12
      $region11: #{tpu_custom_call.1} parent=5 // pred_region
        %s147 = ssub.s32 %s13, 1
        // Predicated region
        $region13: #{tpu_custom_call.1} parent=11 // pred_check
          %p148 = pneg %p86
        $region14: #{tpu_custom_call.1} parent=11 // pred_check_branch
          %150 = sbr.rel (%p148) target = $region16
        $region15: #{tpu_custom_call.1} parent=11 // pred_region
          _
        $region16: #{tpu_custom_call.1} parent=11 // pred_fallthru
          _
        // Predicated region
        $region17: #{tpu_custom_call.1} parent=11 // pred_check
          %p151 = pneg %p107
        $region18: #{tpu_custom_call.1} parent=11 // pred_check_branch
          %153 = sbr.rel (%p151) target = $region20
        $region19: #{tpu_custom_call.1} parent=11 // pred_region
          _
        $region20: #{tpu_custom_call.1} parent=11 // pred_fallthru
          _
      $region12: #{tpu_custom_call.1} parent=5 // pred_fallthru
        _
      %p154 = scmp.lt.s32.totalorder %s13, 2
      // Predicated region
      $region21: #{tpu_custom_call.1} parent=5 // pred_check
        %p155 = pneg %p154
      $region22: #{tpu_custom_call.1} parent=5 // pred_check_branch
        %157 = sbr.rel (%p155) target = $region24
      $region23: #{tpu_custom_call.1} parent=5 // pred_region
        // Predicated region
        $region25: #{tpu_custom_call.1} parent=23 // pred_check
          %p158 = pneg %p33
        $region26: #{tpu_custom_call.1} parent=23 // pred_check_branch
          %160 = sbr.rel (%p158) target = $region28
        $region27: #{tpu_custom_call.1} parent=23 // pred_region
          %p161 = scmp.lt.s32.totalorder %s13, 1
          %s162 = scalar_select %p161, %s13, 1
          %s163 = smul.addr %s162, 8
          %s164 = scalar_lea.vmem %s0, %s163
        $region28: #{tpu_custom_call.1} parent=23 // pred_fallthru
          _
        // Predicated region
        $region29: #{tpu_custom_call.1} parent=23 // pred_check
          %p165 = pneg %p59
        $region30: #{tpu_custom_call.1} parent=23 // pred_check_branch
          %167 = sbr.rel (%p165) target = $region32
        $region31: #{tpu_custom_call.1} parent=23 // pred_region
          %p168 = scmp.lt.s32.totalorder %s13, 1
          %s169 = scalar_select %p168, %s13, 1
          %s170 = smul.addr %s169, 8
          %s171 = scalar_lea.vmem %s1, %s170
        $region32: #{tpu_custom_call.1} parent=23 // pred_fallthru
          _
      $region24: #{tpu_custom_call.1} parent=5 // pred_fallthru
        _
      %p172 = scmp.le.s32.totalorder 1, %s13
      %p173 = scmp.lt.s32.totalorder %s13, 3
      %p174 = pnand %p172, %p173
      %p175 = pneg %p174
      // Predicated region
      $region33: #{tpu_custom_call.1} parent=5 // pred_check
        _
      $region34: #{tpu_custom_call.1} parent=5 // pred_check_branch
        %177 = sbr.rel (%p174) target = $region36
      $region35: #{tpu_custom_call.1} parent=5 // pred_region
        %s178 = ssub.s32 %s13, 1
        %p179 = scmp.lt.s32.totalorder %s18, 1
        %s180 = scalar_select %p179, %s18, 1
        %s181 = smul.addr %s180, 8
        %s182 = scalar_lea.vmem %s0, %s181
        %p183 = pneg %p39
        %p184 = pneg %p36
        %p185 = scmp.lt.s32.totalorder %s18, 1
        %s186 = scalar_select %p185, %s18, 1
        %s187 = smul.addr %s186, 8
        %s188 = scalar_lea.vmem %s1, %s187
        %p189 = pneg %p65
        %p190 = pneg %p62
        %p191 = pneg %p86
        %p192 = pneg %p83
        %p193 = pneg %p107
        %p194 = pneg %p104
        %p195 = pneg %p133
        %p196 = pneg %p130
        %s197 = sand.u32 %s120, 1
        %s198 = scalar_lea.sflag [#allocation3], %s197
        %s199 = sand.u32 %s120, 1
        %s200 = smul.addr %s199, 8
        %s201 = scalar_lea.vmem [#allocation2], %s200
        %p202 = scmp.lt.s32.totalorder %s18, 1
        %s203 = scalar_select %p202, %s18, 1
        %s204 = smul.addr %s203, 8
        %s205 = scalar_lea.vmem %s0, %s204
        %p206 = scmp.lt.s32.totalorder %s18, 1
        %s207 = scalar_select %p206, %s18, 1
        %s208 = smul.addr %s207, 8
        %s209 = scalar_lea.vmem %s1, %s208
        %v210 = vld [vmem:[%s205] sm:$0xff]
        %v211 = vld [vmem:[%s209] sm:$0xff]
        %v213 = vrot.slane %v210, 7
        %vm215 = vcmask 1040384
        %v216 = vsel %vm215, %v213, %v213
        %v217 = vrot.slane %v210, 1
        %vm219 = vcmask 1046528
        %v220 = vsel %vm219, %v217, %v217
        %v221 = vlaneseq
        %v222 = vand.u32 %v221, 127
        %223 = vset.pattern.permute.xlu0 3
        %224 = vperm.xlu0 %223, %v211
        %v225 = vpop.permute.xlu0 %224
        %vm226 = vcmp.eq.s32.totalorder %v225, %v222
        %v227 = vadd.s32 %v211, 24
        %228 = vset.pattern.permute.xlu0 2
        %229 = vperm.xlu0 %228, %v227
        %v230 = vpop.permute.xlu0 %229
        %vm231 = vcmp.eq.s32.totalorder %v230, %v222
        %vm232 = vmor %vm226, %vm231
        %v233 = vadd.s32 %v211, 31
        %234 = vset.pattern.permute.xlu0 1
        %235 = vperm.xlu0 %234, %v233
        %v236 = vpop.permute.xlu0 %235
        %vm237 = vcmp.eq.s32.totalorder %v236, %v222
        %vm238 = vmor %vm232, %vm237
        %v239 = vadd.s32 %v211, 63
        %240 = vset.pattern.permute.xlu0 0
        %241 = vperm.xlu0 %240, %v239
        %v242 = vpop.permute.xlu0 %241
        %vm243 = vcmp.eq.s32.totalorder %v242, %v222
        %vm244 = vmor %vm238, %vm243
        %v245 = vsel %vm244, 1, 0
        %v246 = vcvt.s32.f32 %v245
        %v247 = vld [vmem:[%s2] sm:$0x7f]
        %s248 = scalar_lea.vmem %s2, 8
        %v249 = vld [vmem:[%s248] sm:$0x7f]
        %vm250 = vcmask 56320
        %v251 = vsel %vm250, %v210, 0
        %v254 = vsel %vm219, %v249, 0
        %256 = vmatprep.subr.mxu0 0.0
        %257 = vmatpush1.msra.mxu0 %v254
        %258 = vmatprep.subr.mxu0 0.0
        %259 = vmatpush1.msra.mxu0 0.0
        %260 = vmatprep.subr.mxu0 0.0
        %261 = vmatpush1.msra.mxu0 0.0
        %262 = vmatprep.subr.mxu0 0.0
        %263 = vmatpush1.msra.mxu0 0.0
        %264 = vmatprep.subr.mxu0 0.0
        %265 = vmatpush1.msra.mxu0 0.0
        %266 = vmatprep.subr.mxu0 0.0
        %267 = vmatpush1.msra.mxu0 0.0
        %268 = vmatprep.subr.mxu0 0.0
        %269 = vmatpush1.msra.mxu0 0.0
        %270 = vmatprep.subr.mxu0 0.0
        %271 = vmatpush1.msra.mxu0 0.0
        %272 = vmatprep.subr.mxu0 0.0
        %273 = vmatpush1.msra.mxu0 0.0
        %274 = vmatprep.subr.mxu0 0.0
        %275 = vmatpush1.msra.mxu0 0.0
        %276 = vmatprep.subr.mxu0 0.0
        %277 = vmatpush1.msra.mxu0 0.0
        %278 = vmatprep.subr.mxu0 0.0
        %279 = vmatpush1.msra.mxu0 0.0
        %280 = vmatprep.subr.mxu0 0.0
        %281 = vmatpush1.msra.mxu0 0.0
        %282 = vmatprep.subr.mxu0 0.0
        %283 = vmatpush1.msra.mxu0 0.0
        %284 = vmatprep.subr.mxu0 0.0
        %285 = vmatpush1.msra.mxu0 0.0
        %286 = vmatprep.subr.mxu0 0.0
        %287 = vmatpush1.msra.mxu0 0.0
        %288 = vmatprep.subr.mxu0 0.0
        %289 = vmatpush1.msra.mxu0 0.0
        %290 = vmatprep.subr.mxu0 0.0
        %291 = vmatpush1.msra.mxu0 0.0
        %292 = vmatprep.subr.mxu0 0.0
        %293 = vmatpush1.msra.mxu0 0.0
        %294 = vmatprep.subr.mxu0 0.0
        %295 = vmatpush1.msra.mxu0 0.0
        %296 = vmatprep.subr.mxu0 0.0
        %297 = vmatpush1.msra.mxu0 0.0
        %298 = vmatprep.subr.mxu0 0.0
        %299 = vmatpush1.msra.mxu0 0.0
        %300 = vmatprep.subr.mxu0 0.0
        %301 = vmatpush1.msra.mxu0 0.0
        %302 = vmatprep.subr.mxu0 0.0
        %303 = vmatpush1.msra.mxu0 0.0
        %304 = vmatprep.subr.mxu0 0.0
        %305 = vmatpush1.msra.mxu0 0.0
        %306 = vmatprep.subr.mxu0 0.0
        %307 = vmatpush1.msra.mxu0 0.0
        %308 = vmatprep.subr.mxu0 0.0
        %309 = vmatpush1.msra.mxu0 0.0
        %310 = vmatprep.subr.mxu0 0.0
        %311 = vmatpush1.msra.mxu0 0.0
        %312 = vmatprep.subr.mxu0 0.0
        %313 = vmatpush1.msra.mxu0 0.0
        %314 = vmatprep.subr.mxu0 0.0
        %315 = vmatpush1.msra.mxu0 0.0
        %316 = vmatprep.subr.mxu0 0.0
        %317 = vmatpush1.msra.mxu0 0.0
        %318 = vmatprep.subr.mxu0 0.0
        %319 = vmatpush1.msra.mxu0 0.0
        %320 = vmatprep.mubr.f32.mxu0 0.0
        %321 = vmatmul.mubr.f32.gmra.mrb[0].mxu0 %v251
        %v322 = vpop.f32.mrb[0].mxu0
        %v323 = vadd.f32 0.0, %v322
        %v324 = vpop.f32.mrb[0].mxu0
        %325 = vdwg.mxu0
        %v327 = vsel %vm250, %v216, 0
        %v330 = vsel %vm219, %v247, 0
        %332 = vmatprep.subr.mxu0 0.0
        %333 = vmatpush1.msra.mxu0 %v330
        %334 = vmatprep.subr.mxu0 0.0
        %335 = vmatpush1.msra.mxu0 0.0
        %336 = vmatprep.subr.mxu0 0.0
        %337 = vmatpush1.msra.mxu0 0.0
        %338 = vmatprep.subr.mxu0 0.0
        %339 = vmatpush1.msra.mxu0 0.0
        %340 = vmatprep.subr.mxu0 0.0
        %341 = vmatpush1.msra.mxu0 0.0
        %342 = vmatprep.subr.mxu0 0.0
        %343 = vmatpush1.msra.mxu0 0.0
        %344 = vmatprep.subr.mxu0 0.0
        %345 = vmatpush1.msra.mxu0 0.0
        %346 = vmatprep.subr.mxu0 0.0
        %347 = vmatpush1.msra.mxu0 0.0
        %348 = vmatprep.subr.mxu0 0.0
        %349 = vmatpush1.msra.mxu0 0.0
        %350 = vmatprep.subr.mxu0 0.0
        %351 = vmatpush1.msra.mxu0 0.0
        %352 = vmatprep.subr.mxu0 0.0
        %353 = vmatpush1.msra.mxu0 0.0
        %354 = vmatprep.subr.mxu0 0.0
        %355 = vmatpush1.msra.mxu0 0.0
        %356 = vmatprep.subr.mxu0 0.0
        %357 = vmatpush1.msra.mxu0 0.0
        %358 = vmatprep.subr.mxu0 0.0
        %359 = vmatpush1.msra.mxu0 0.0
        %360 = vmatprep.subr.mxu0 0.0
        %361 = vmatpush1.msra.mxu0 0.0
        %362 = vmatprep.subr.mxu0 0.0
        %363 = vmatpush1.msra.mxu0 0.0
        %364 = vmatprep.subr.mxu0 0.0
        %365 = vmatpush1.msra.mxu0 0.0
        %366 = vmatprep.subr.mxu0 0.0
        %367 = vmatpush1.msra.mxu0 0.0
        %368 = vmatprep.subr.mxu0 0.0
        %369 = vmatpush1.msra.mxu0 0.0
        %370 = vmatprep.subr.mxu0 0.0
        %371 = vmatpush1.msra.mxu0 0.0
        %372 = vmatprep.subr.mxu0 0.0
        %373 = vmatpush1.msra.mxu0 0.0
        %374 = vmatprep.subr.mxu0 0.0
        %375 = vmatpush1.msra.mxu0 0.0
        %376 = vmatprep.subr.mxu0 0.0
        %377 = vmatpush1.msra.mxu0 0.0
        %378 = vmatprep.subr.mxu0 0.0
        %379 = vmatpush1.msra.mxu0 0.0
        %380 = vmatprep.subr.mxu0 0.0
        %381 = vmatpush1.msra.mxu0 0.0
        %382 = vmatprep.subr.mxu0 0.0
        %383 = vmatpush1.msra.mxu0 0.0
        %384 = vmatprep.subr.mxu0 0.0
        %385 = vmatpush1.msra.mxu0 0.0
        %386 = vmatprep.subr.mxu0 0.0
        %387 = vmatpush1.msra.mxu0 0.0
        %388 = vmatprep.subr.mxu0 0.0
        %389 = vmatpush1.msra.mxu0 0.0
        %390 = vmatprep.subr.mxu0 0.0
        %391 = vmatpush1.msra.mxu0 0.0
        %392 = vmatprep.subr.mxu0 0.0
        %393 = vmatpush1.msra.mxu0 0.0
        %394 = vmatprep.subr.mxu0 0.0
        %395 = vmatpush1.msra.mxu0 0.0
        %396 = vmatprep.mubr.f32.mxu0 0.0
        %397 = vmatmul.mubr.f32.gmra.mrb[0].mxu0 %v327
        %v398 = vpop.f32.mrb[0].mxu0
        %v399 = vadd.f32 %v323, %v398
        %v400 = vpop.f32.mrb[0].mxu0
        %401 = vdwg.mxu0
        %s402 = scalar_lea.vmem %s2, 16
        %v403 = vld [vmem:[%s402] sm:$0x7f]
        %v405 = vsel %vm250, %v220, 0
        %v408 = vsel %vm219, %v403, 0
        %410 = vmatprep.subr.mxu0 0.0
        %411 = vmatpush1.msra.mxu0 %v408
        %412 = vmatprep.subr.mxu0 0.0
        %413 = vmatpush1.msra.mxu0 0.0
        %414 = vmatprep.subr.mxu0 0.0
        %415 = vmatpush1.msra.mxu0 0.0
        %416 = vmatprep.subr.mxu0 0.0
        %417 = vmatpush1.msra.mxu0 0.0
        %418 = vmatprep.subr.mxu0 0.0
        %419 = vmatpush1.msra.mxu0 0.0
        %420 = vmatprep.subr.mxu0 0.0
        %421 = vmatpush1.msra.mxu0 0.0
        %422 = vmatprep.subr.mxu0 0.0
        %423 = vmatpush1.msra.mxu0 0.0
        %424 = vmatprep.subr.mxu0 0.0
        %425 = vmatpush1.msra.mxu0 0.0
        %426 = vmatprep.subr.mxu0 0.0
        %427 = vmatpush1.msra.mxu0 0.0
        %428 = vmatprep.subr.mxu0 0.0
        %429 = vmatpush1.msra.mxu0 0.0
        %430 = vmatprep.subr.mxu0 0.0
        %431 = vmatpush1.msra.mxu0 0.0
        %432 = vmatprep.subr.mxu0 0.0
        %433 = vmatpush1.msra.mxu0 0.0
        %434 = vmatprep.subr.mxu0 0.0
        %435 = vmatpush1.msra.mxu0 0.0
        %436 = vmatprep.subr.mxu0 0.0
        %437 = vmatpush1.msra.mxu0 0.0
        %438 = vmatprep.subr.mxu0 0.0
        %439 = vmatpush1.msra.mxu0 0.0
        %440 = vmatprep.subr.mxu0 0.0
        %441 = vmatpush1.msra.mxu0 0.0
        %442 = vmatprep.subr.mxu0 0.0
        %443 = vmatpush1.msra.mxu0 0.0
        %444 = vmatprep.subr.mxu0 0.0
        %445 = vmatpush1.msra.mxu0 0.0
        %446 = vmatprep.subr.mxu0 0.0
        %447 = vmatpush1.msra.mxu0 0.0
        %448 = vmatprep.subr.mxu0 0.0
        %449 = vmatpush1.msra.mxu0 0.0
        %450 = vmatprep.subr.mxu0 0.0
        %451 = vmatpush1.msra.mxu0 0.0
        %452 = vmatprep.subr.mxu0 0.0
        %453 = vmatpush1.msra.mxu0 0.0
        %454 = vmatprep.subr.mxu0 0.0
        %455 = vmatpush1.msra.mxu0 0.0
        %456 = vmatprep.subr.mxu0 0.0
        %457 = vmatpush1.msra.mxu0 0.0
        %458 = vmatprep.subr.mxu0 0.0
        %459 = vmatpush1.msra.mxu0 0.0
        %460 = vmatprep.subr.mxu0 0.0
        %461 = vmatpush1.msra.mxu0 0.0
        %462 = vmatprep.subr.mxu0 0.0
        %463 = vmatpush1.msra.mxu0 0.0
        %464 = vmatprep.subr.mxu0 0.0
        %465 = vmatpush1.msra.mxu0 0.0
        %466 = vmatprep.subr.mxu0 0.0
        %467 = vmatpush1.msra.mxu0 0.0
        %468 = vmatprep.subr.mxu0 0.0
        %469 = vmatpush1.msra.mxu0 0.0
        %470 = vmatprep.subr.mxu0 0.0
        %471 = vmatpush1.msra.mxu0 0.0
        %472 = vmatprep.subr.mxu0 0.0
        %473 = vmatpush1.msra.mxu0 0.0
        %474 = vmatprep.mubr.f32.mxu0 0.0
        %475 = vmatmul.mubr.f32.gmra.mrb[0].mxu0 %v405
        %v476 = vpop.f32.mrb[0].mxu0
        %v477 = vadd.f32 0.0, %v476
        %v478 = vpop.f32.mrb[0].mxu0
        %479 = vdwg.mxu0
        %v480 = vadd.f32 %v399, %v477
        %v481 = vld [vmem:[%s3] sm:$0xff]
        %v482 = vld [vmem:[%s3 + $0x8] sm:$0xff]
        %v483 = vld [vmem:[%s3 + $0x10] sm:$0xff]
        %v484 = vld [vmem:[%s3 + $0x18] sm:$0xff]
        %v485 = vld [vmem:[%s3 + $0x20] sm:$0xff]
        %v486 = vld [vmem:[%s3 + $0x28] sm:$0xff]
        %v487 = vld [vmem:[%s3 + $0x30] sm:$0xff]
        %v488 = vld [vmem:[%s3 + $0x38] sm:$0xff]
        %v489 = vld [vmem:[%s3 + $0x40] sm:$0xff]
        %v490 = vld [vmem:[%s3 + $0x48] sm:$0xff]
        %v491 = vld [vmem:[%s3 + $0x50] sm:$0xff]
        %v492 = vld [vmem:[%s3 + $0x58] sm:$0xff]
        %v493 = vld [vmem:[%s3 + $0x60] sm:$0xff]
        %v494 = vld [vmem:[%s3 + $0x68] sm:$0xff]
        %v495 = vld [vmem:[%s3 + $0x70] sm:$0xff]
        %v496 = vld [vmem:[%s3 + $0x78] sm:$0xff]
        %497 = vmatprep.subr.mxu0 0.0
        %498 = vmatpush1.msra.mxu0 %v481
        %499 = vmatprep.subr.mxu0 0.0
        %500 = vmatpush1.msra.mxu0 %v482
        %501 = vmatprep.subr.mxu0 0.0
        %502 = vmatpush1.msra.mxu0 %v483
        %503 = vmatprep.subr.mxu0 0.0
        %504 = vmatpush1.msra.mxu0 %v484
        %505 = vmatprep.subr.mxu0 0.0
        %506 = vmatpush1.msra.mxu0 %v485
        %507 = vmatprep.subr.mxu0 0.0
        %508 = vmatpush1.msra.mxu0 %v486
        %509 = vmatprep.subr.mxu0 0.0
        %510 = vmatpush1.msra.mxu0 %v487
        %511 = vmatprep.subr.mxu0 0.0
        %512 = vmatpush1.msra.mxu0 %v488
        %513 = vmatprep.subr.mxu0 0.0
        %514 = vmatpush1.msra.mxu0 %v489
        %515 = vmatprep.subr.mxu0 0.0
        %516 = vmatpush1.msra.mxu0 %v490
        %517 = vmatprep.subr.mxu0 0.0
        %518 = vmatpush1.msra.mxu0 %v491
        %519 = vmatprep.subr.mxu0 0.0
        %520 = vmatpush1.msra.mxu0 %v492
        %521 = vmatprep.subr.mxu0 0.0
        %522 = vmatpush1.msra.mxu0 %v493
        %523 = vmatprep.subr.mxu0 0.0
        %524 = vmatpush1.msra.mxu0 %v494
        %525 = vmatprep.subr.mxu0 0.0
        %526 = vmatpush1.msra.mxu0 %v495
        %527 = vmatprep.subr.mxu0 0.0
        %528 = vmatpush1.msra.mxu0 %v496
        %529 = vmatprep.subr.mxu0 0.0
        %530 = vmatpush1.msra.mxu0 0.0
        %531 = vmatprep.subr.mxu0 0.0
        %532 = vmatpush1.msra.mxu0 0.0
        %533 = vmatprep.subr.mxu0 0.0
        %534 = vmatpush1.msra.mxu0 0.0
        %535 = vmatprep.subr.mxu0 0.0
        %536 = vmatpush1.msra.mxu0 0.0
        %537 = vmatprep.subr.mxu0 0.0
        %538 = vmatpush1.msra.mxu0 0.0
        %539 = vmatprep.subr.mxu0 0.0
        %540 = vmatpush1.msra.mxu0 0.0
        %541 = vmatprep.subr.mxu0 0.0
        %542 = vmatpush1.msra.mxu0 0.0
        %543 = vmatprep.subr.mxu0 0.0
        %544 = vmatpush1.msra.mxu0 0.0
        %545 = vmatprep.subr.mxu0 0.0
        %546 = vmatpush1.msra.mxu0 0.0
        %547 = vmatprep.subr.mxu0 0.0
        %548 = vmatpush1.msra.mxu0 0.0
        %549 = vmatprep.subr.mxu0 0.0
        %550 = vmatpush1.msra.mxu0 0.0
        %551 = vmatprep.subr.mxu0 0.0
        %552 = vmatpush1.msra.mxu0 0.0
        %553 = vmatprep.subr.mxu0 0.0
        %554 = vmatpush1.msra.mxu0 0.0
        %555 = vmatprep.subr.mxu0 0.0
        %556 = vmatpush1.msra.mxu0 0.0
        %557 = vmatprep.subr.mxu0 0.0
        %558 = vmatpush1.msra.mxu0 0.0
        %559 = vmatprep.subr.mxu0 0.0
        %560 = vmatpush1.msra.mxu0 0.0
        %561 = vmatprep.mubr.f32.mxu0 0.0
        %562 = vmatmul.mubr.f32.gmra.mrb[0].mxu0 %v246
        %v563 = vpop.f32.mrb[0].mxu0
        %v564 = vadd.f32 0.0, %v563
        %v565 = vpop.f32.mrb[0].mxu0
        %566 = vdwg.mxu0
        %v567 = vadd.f32 %v480, %v564
        %vm568 = vcmask 261120
        %569 = vst.msk [vmem:[%s201] sm:$0xff] %vm568, %v567
        %s570 = sand.u32 %s120, 1
        %s571 = scalar_lea.sflag [#allocation3], %s570
        %s572 = sand.u32 %s120, 1
        %s573 = smul.addr %s572, 8
        %s574 = scalar_lea.vmem [#allocation2], %s573
        // Predicated region
        $region37: #{tpu_custom_call.1} parent=35 // pred_check
          %p575 = pneg %p130
        $region38: #{tpu_custom_call.1} parent=35 // pred_check_branch
          %577 = sbr.rel (%p575) target = $region40
        $region39: #{tpu_custom_call.1} parent=35 // pred_region
          %s579 = ssub.s32 128, 128
          %580 = vsyncadd %s571, %s579
          %s581 = smul.addr %s18, 128
          %s582 = scalar_lea.hbm %s4, %s581
          %s584 = sshll.u32 %s574, 4
          %s585 = int_to_ptr.vmem [resolvable:$true] %s584
          %587 = dma.vmem_to_hbm [thread:$0]  %s585, 128, %s582, %s571
        $region40: #{tpu_custom_call.1} parent=35 // pred_fallthru
          _
      $region36: #{tpu_custom_call.1} parent=5 // pred_fallthru
        _
      %p588 = scmp.le.s32.totalorder 2, %s13
      // Predicated region
      $region41: #{tpu_custom_call.1} parent=5 // pred_check
        %p589 = pneg %p588
      $region42: #{tpu_custom_call.1} parent=5 // pred_check_branch
        %591 = sbr.rel (%p589) target = $region44
      $region43: #{tpu_custom_call.1} parent=5 // pred_region
        %s592 = ssub.s32 %s13, 2
        // Predicated region
        $region45: #{tpu_custom_call.1} parent=43 // pred_check
          %p593 = pneg %p136
        $region46: #{tpu_custom_call.1} parent=43 // pred_check_branch
          %595 = sbr.rel (%p593) target = $region48
        $region47: #{tpu_custom_call.1} parent=43 // pred_region
          %s596 = sand.u32 %s121, 1
          %s597 = scalar_lea.sflag [#allocation3], %s596
          %s598 = sand.u32 %s121, 1
          %s599 = smul.addr %s598, 8
          %s600 = scalar_lea.vmem [#allocation2], %s599
          %601 = dma.done %s597, 128
        $region48: #{tpu_custom_call.1} parent=43 // pred_fallthru
          _
      $region44: #{tpu_custom_call.1} parent=5 // pred_fallthru
        _
    $region6: #{tpu_custom_call.1} parent=1 // loop_footer
      %s17 = sadd.s32 1, %s13
    $region7: #{tpu_custom_call.1} parent=1 // loop_footer_branch
      %12 = sbr.rel target = $region3
    $region8: #{tpu_custom_call.1} parent=1 // loop_exit
      _
    %602 = vsyncpa [#allocation3], 1
    %s603 = scalar_lea.sflag [#allocation3], 1
    %604 = vsyncpa %s603, 1

</llo_original>
